<compile_context>
chip_gen: v7x
topology: tpu7x:2x2x1
jax: 0.10.0
libtpu: 0.0.40
codegen_flags: <defaults>
</compile_context>

<pallas_src>
import numpy as np

import jax
import jax.numpy as jnp
from jax.experimental import pallas as pl
from jax.experimental.pallas import tpu as pltpu


# ----------------------------------------------------------------------------
# Primary path: zero-copy alias (requires buffer donation).
# ----------------------------------------------------------------------------
def _identity_ae_alias_kernel(x_hbm_ref, y_hbm_ref, z_ref):
    # x and y refer to the SAME HBM buffer (input_output_aliases={0: 0} plus
    # donate_argnums=0 on the jit), so the identity pass-through needs zero
    # data movement — nothing to do on the tensor path.
    del x_hbm_ref, y_hbm_ref
    # Auxiliary zeros(1) output: a single scalar write to SMEM.
    z_ref[0] = jnp.float32(0.0)


def _identity_ae_alias(x):
    y, zeros = pl.pallas_call(
        _identity_ae_alias_kernel,
        out_shape=(
            jax.ShapeDtypeStruct(x.shape, x.dtype),   # pass-through tensor
            jax.ShapeDtypeStruct((1,), jnp.float32),  # zeros(1)
        ),
        in_specs=[pl.BlockSpec(memory_space=pl.ANY)],   # raw HBM ref, no DMA
        out_specs=(
            pl.BlockSpec(memory_space=pl.ANY),          # aliased to the input
            pl.BlockSpec(memory_space=pltpu.SMEM),      # scalar zero
        ),
        input_output_aliases={0: 0},                    # elide the copy
        cost_estimate=pl.CostEstimate(
            flops=0, transcendentals=0, bytes_accessed=4
        ),
    )(x)
    return y, zeros


# donate_argnums=0 guarantees the alias is copy-free: X's buffer is handed to
# the output, so there is no hidden defensive HBM->HBM copy.  NOTE: callers
# must not use `x` after this call (it is donated).
identity_ae_forward = jax.jit(_identity_ae_alias, donate_argnums=0)


# ----------------------------------------------------------------------------
# Fallback path: caller cannot donate x -> do the unavoidable copy ourselves
# as a lane-dense, double-buffered VMEM pipeline at HBM roofline.
# ----------------------------------------------------------------------------
_LANES = 1024      # lane-dense: large multiple of 128 -> unmasked vst
_ROW_TILE = 1024   # <= 1024x1024 f32 = 4 MiB per tile (v7x VMEM-safe)


def _copy_kernel(x_ref, o_ref):
    o_ref[...] = x_ref[...]


def _identity_ae_copy(x):
    n = x.size
    if n % _LANES == 0:
        rows = n // _LANES
        row_tile = min(rows, _ROW_TILE)
        x2 = x.reshape(rows, _LANES)
        y2 = pl.pallas_call(
            _copy_kernel,
            out_shape=jax.ShapeDtypeStruct((rows, _LANES), x.dtype),
            grid=(pl.cdiv(rows, row_tile),),
            in_specs=[pl.BlockSpec((row_tile, _LANES), lambda i: (i, 0))],
            out_specs=pl.BlockSpec((row_tile, _LANES), lambda i: (i, 0)),
            compiler_params=pltpu.CompilerParams(
                dimension_semantics=("parallel",),      # v7x: split over 2 TCs
                vmem_limit_bytes=32 * 1024 * 1024,      # v7x 64 MiB physical
            ),
        )(x2)
        y = y2.reshape(x.shape)
    else:
        # Small / irregular shapes: single full-array block copy.
        y = pl.pallas_call(
            _copy_kernel,
            out_shape=jax.ShapeDtypeStruct(x.shape, x.dtype),
            in_specs=[pl.BlockSpec(memory_space=pltpu.VMEM)],
            out_specs=pl.BlockSpec(memory_space=pltpu.VMEM),
        )(x)
    # zeros(1) hoisted to a constant (per review: no kernel work needed).
    return y, jnp.zeros((1,), jnp.float32)


identity_ae_copy_forward = jax.jit(_identity_ae_copy)


if __name__ == "__main__":
    key = jax.random.PRNGKey(0)
    x = jax.random.normal(key, (2, 4, 16, 16), dtype=jnp.float32)  # NCHW
    x_host = np.asarray(x)  # host copy for comparison (x is donated below)

    # --- Fallback (non-donating) explicit-copy path, while x is still live ---
    y2, z2 = identity_ae_copy_forward(x)
    jax.block_until_ready((y2, z2))
    assert y2.shape == x.shape and y2.dtype == x.dtype
    assert np.array_equal(np.asarray(y2), x_host)
    assert z2.shape == (1,) and z2.dtype == jnp.float32 and float(z2[0]) == 0.0

    # Exercise the lane-dense tiled branch of the fallback as well.
    x_big = jax.random.normal(jax.random.PRNGKey(1), (16, 1024), jnp.float32)
    x_big_host = np.asarray(x_big)
    y3, z3 = identity_ae_copy_forward(x_big)
    jax.block_until_ready((y3, z3))
    assert np.array_equal(np.asarray(y3), x_big_host)
    assert float(z3[0]) == 0.0

    # --- Primary zero-copy path (buffer donated, x must not be used after) ---
    y, z = identity_ae_forward(x)
    jax.block_until_ready((y, z))
    assert y.shape == tuple(x_host.shape) and y.dtype == jnp.float32
    assert np.array_equal(np.asarray(y), x_host)
    assert z.shape == (1,) and z.dtype == jnp.float32 and float(z[0]) == 0.0

    print("KERNEL_OK")
</pallas_src>

<mosaic_0001>
module attributes {stable_mosaic.version = 11 : i64} {
  func.func @_copy_kernel(%arg0: i32, %arg1: memref<2x1024xf32, #tpu.memory_space<vmem>>, %arg2: memref<2x1024xf32, #tpu.memory_space<vmem>>) attributes {dimension_semantics = [#tpu.dimension_semantics<parallel>], iteration_bounds = array<i64: 1>, scalar_prefetch = 0 : i64, scratch_operands = 0 : i64, tpu.core_type = #tpu.core_type<tc>, window_params = [{transform_indices = @transform_0, window_bounds = array<i64: 2, 1024>}, {transform_indices = @transform_1, window_bounds = array<i64: 2, 1024>}]} {
    %c0 = arith.constant 0 : index
    %c0_0 = arith.constant 0 : index
    %0 = vector.load %arg1[%c0, %c0_0] : memref<2x1024xf32, #tpu.memory_space<vmem>>, vector<2x1024xf32>
    %c0_1 = arith.constant 0 : index
    %c0_2 = arith.constant 0 : index
    %1 = vector.load %arg2[%c0_1, %c0_2] : memref<2x1024xf32, #tpu.memory_space<vmem>>, vector<2x1024xf32>
    tpu.vector_store %arg2[%c0_1, %c0_2], %0 {strides = array<i32>} : memref<2x1024xf32, #tpu.memory_space<vmem>>, vector<2x1024xf32>,
    return
  }
  func.func @transform_0(%arg0: i32) -> (i32, i32) {
    %c0_i32 = arith.constant 0 : i32
    %c0_i32_0 = arith.constant 0 : i32
    return %arg0, %c0_i32 : i32, i32
  }
  func.func @transform_1(%arg0: i32) -> (i32, i32) {
    %c0_i32 = arith.constant 0 : i32
    %c0_i32_0 = arith.constant 0 : i32
    return %arg0, %c0_i32 : i32, i32
  }
}

</mosaic_0001>

<llo_original>
// kernel: _identity_ae_copy.1
$region0: #{_identity_ae_copy.1}
  #allocation0 [shape = 'u32[]', space=smem, size = 0x4, offset = 0x4, fixed_abs, tag = 'smem constant byte address 0x4 - core index']
  #allocation1 [shape = 'u32[144,128]{1,0:T(1,128)}', space=vmem, size = 0x12000, scoped, tag = 'internal scratch']
  %s0 = inlined_call_operand.vmem [shape: f32[2,1024], index: 0, kind: input, shape index: {}]
  %s1 = inlined_call_operand.vmem [shape: f32[2,1024], index: 1, kind: output, shape index: {}]
  %s2 = sld [smem:[#allocation0]]
  $region14: #{_identity_ae_copy.1} parent=0
    _
  %s4 = ssub.s32 1, %s2
  %s5 = scalar_select 0, %s4, %s2
  // Predicated region
  $region2: #{_identity_ae_copy.1} parent=0 // pred_check
    _
  $region3: #{_identity_ae_copy.1} parent=0 // pred_check_branch
    %7 = sbr.rel (0) target = $region5
  $region4: #{_identity_ae_copy.1} parent=0 // pred_region
    _
  $region5: #{_identity_ae_copy.1} parent=0 // pred_fallthru
    _
  %v8 = vld [vmem:[%s0] sm:$0xff]
  %v9 = vld [vmem:[%s0 + $0x8] sm:$0xff]
  %10 = vst [vmem:[%s1] sm:$0xff] %v8
  %11 = vst [vmem:[%s1 + $0x8] sm:$0xff] %v9
  // Predicated region
  $region6: #{_identity_ae_copy.1} parent=0 // pred_check
    _
  $region7: #{_identity_ae_copy.1} parent=0 // pred_check_branch
    %13 = sbr.rel (0) target = $region9
  $region8: #{_identity_ae_copy.1} parent=0 // pred_region
    _
  $region9: #{_identity_ae_copy.1} parent=0 // pred_fallthru
    _
  // Predicated region
  $region10: #{_identity_ae_copy.1} parent=0 // pred_check
    _
  $region11: #{_identity_ae_copy.1} parent=0 // pred_check_branch
    %15 = sbr.rel (0) target = $region13
  $region12: #{_identity_ae_copy.1} parent=0 // pred_region
    _
  $region13: #{_identity_ae_copy.1} parent=0 // pred_fallthru
    _

</llo_original>
